<compile_context>
chip_gen: v5e
topology: v5e:2x2
jax: 0.10.0
libtpu: 0.0.40
codegen_flags: <defaults>
</compile_context>

<pallas_src>
import functools

import numpy as np
import jax
import jax.numpy as jnp
from jax.experimental import pallas as pl
from jax.experimental.pallas import tpu as pltpu


def _round_up(x, m):
    return (x + m - 1) // m * m


def _gkan_fused_kernel(x_ref, coef_ref, o_ref, *, n_layers, scaled_centers,
                       zoom_w, pan_w):
    """Fused GaussianKAN forward for one batch tile.

    x_ref:    (TB, Wpad)            zero-padded input activations
    coef_ref: (L, G*Wpad, Wpad)     per-layer (grid*in, out) weight slabs (zero-padded)
    o_ref:    (TB, Wpad)            zero-padded output
    """
    x = x_ref[...].astype(jnp.float32)
    for l in range(n_layers):                       # small, static unroll
        # xs = (tanh(x)*zoom + pan) / width         (EUP tanh + VPU fma)
        xs = jnp.tanh(x) * zoom_w + pan_w
        # phi_g = exp(-0.5 * (xs - center_g/width)^2); each piece is a full
        # 128-lane slab, concatenated lane-contiguously -> (TB, G*Wpad).
        phis = [jnp.exp(-0.5 * jnp.square(xs - sc)) for sc in scaled_centers]
        phi = jnp.concatenate(phis, axis=-1)
        # Single MXU matmul per layer: sums over grid AND input features at once.
        x = jnp.dot(phi, coef_ref[l], preferred_element_type=jnp.float32)
    o_ref[...] = x.astype(o_ref.dtype)


class GaussianKANPallas:
    """Mirror of GaussianKAN(layer_sizes, grid_range, grid_count) (forward only)."""

    def __init__(self, layer_sizes, grid_range=(-1.0, 1.0), grid_count=6, key=None):
        self.layer_sizes = [int(s) for s in layer_sizes]
        self.grid_count = int(grid_count)
        lo, hi = float(grid_range[0]), float(grid_range[-1])
        self.centers = np.linspace(lo, hi, grid_count).astype(np.float32)
        self.zoom = (hi - lo) / 2.0
        self.pan = (hi + lo) / 2.0
        self.width = self.zoom / (grid_count - 1)
        # Pre-scaled constants: per-grid op becomes a single subtract.
        self.zoom_w = self.zoom / self.width
        self.pan_w = self.pan / self.width
        self.scaled_centers = tuple(float(c) / self.width for c in self.centers)

        # One lane-dense padded width shared by all layers (KAN widths are tiny).
        self.w_pad = _round_up(max(self.layer_sizes), 128)

        key = key if key is not None else jax.random.PRNGKey(0)
        self.coefs = []            # unpadded (G, I, O), for the pure-JAX reference
        padded = []
        for i in range(1, len(self.layer_sizes)):
            key, sub = jax.random.split(key)
            O, I = self.layer_sizes[i], self.layer_sizes[i - 1]
            # PyTorch: coef = randn(output_size, input_size, grid_count) * 0.1
            c = jax.random.normal(sub, (O, I, self.grid_count), jnp.float32) * 0.1
            c_gio = jnp.transpose(c, (2, 1, 0))                     # (G, I, O)
            self.coefs.append(c_gio)
            cp = jnp.zeros((self.grid_count, self.w_pad, self.w_pad), jnp.float32)
            cp = cp.at[:, :I, :O].set(c_gio)                        # zero-pad rows/cols
            padded.append(cp.reshape(self.grid_count * self.w_pad, self.w_pad))
        # Single stacked weight tensor for the fused kernel: (L, G*Wpad, Wpad).
        self.coef_stack = jnp.stack(padded, axis=0)

    def __call__(self, x):
        B, in_dim = x.shape
        assert in_dim == self.layer_sizes[0]
        Wpad = self.w_pad
        L = self.coef_stack.shape[0]
        K = self.grid_count * Wpad

        # Batch tiling: small batches -> single grid step; large batches get a
        # parallel grid axis (megacore sharding on v7x).
        tb = min(256, _round_up(B, 8))
        B_pad = _round_up(B, tb)
        xp = jnp.zeros((B_pad, Wpad), jnp.float32).at[:B, :in_dim].set(
            x.astype(jnp.float32))

        kernel = functools.partial(
            _gkan_fused_kernel,
            n_layers=L,
            scaled_centers=self.scaled_centers,
            zoom_w=float(self.zoom_w),
            pan_w=float(self.pan_w),
        )

        out = pl.pallas_call(
            kernel,
            out_shape=jax.ShapeDtypeStruct((B_pad, Wpad), jnp.float32),
            grid=(B_pad // tb,),
            in_specs=[
                pl.BlockSpec((tb, Wpad), lambda b: (b, 0)),        # activation tile
                pl.BlockSpec((L, K, Wpad), lambda b: (0, 0, 0)),   # weights, resident
            ],
            out_specs=pl.BlockSpec((tb, Wpad), lambda b: (b, 0)),
            compiler_params=pltpu.CompilerParams(
                dimension_semantics=("parallel",)),
        )(xp, self.coef_stack)

        # Strip the zero padding (columns and any padded batch rows).
        return out[:B, :self.layer_sizes[-1]]


def _ref_forward(model, x):
    """Pure-JAX reference matching the PyTorch code exactly (uses unpadded coefs)."""
    centers = jnp.asarray(model.centers)
    for coef in model.coefs:                                        # (G, I, O)
        xt = jnp.tanh(x) * model.zoom + model.pan                   # (B, I)
        phi = jnp.exp(
            -0.5 * ((xt[:, :, None] - centers[None, None, :]) / model.width) ** 2
        )                                                           # (B, I, G)
        x = jnp.einsum("big,gio->bo", phi, coef)                    # (B, O)
    return x


if __name__ == "__main__":
    key = jax.random.PRNGKey(0)
    kx, kp = jax.random.split(key)

    layer_sizes = [16, 32, 8]
    batch = 8
    x = jax.random.normal(kx, (batch, layer_sizes[0]), jnp.float32)

    model = GaussianKANPallas(layer_sizes, grid_range=(-1.0, 1.0), grid_count=6, key=kp)

    out = model(x)
    out = jax.block_until_ready(out)
    assert out.shape == (batch, layer_sizes[-1]), out.shape

    ref = _ref_forward(model, x)
    assert jnp.allclose(out, ref, rtol=1e-4, atol=1e-4), "Pallas kernel mismatch vs reference"

    print("KERNEL_OK")
</pallas_src>

<mosaic_0001>
module attributes {stable_mosaic.version = 11 : i64} {
  func.func @_gkan_fused_kernel(%arg0: i32, %arg1: memref<8x128xf32, #tpu.memory_space<vmem>>, %arg2: memref<2x768x128xf32, #tpu.memory_space<vmem>>, %arg3: memref<8x128xf32, #tpu.memory_space<vmem>>) attributes {dimension_semantics = [#tpu.dimension_semantics<parallel>], iteration_bounds = array<i64: 1>, scalar_prefetch = 0 : i64, scratch_operands = 0 : i64, tpu.core_type = #tpu.core_type<tc>, window_params = [{transform_indices = @transform_0, window_bounds = array<i64: 8, 128>}, {pipeline_mode = #tpu.pipeline_mode<synchronous>, transform_indices = @transform_1, window_bounds = array<i64: 2, 768, 128>}, {transform_indices = @transform_2, window_bounds = array<i64: 8, 128>}]} {
    %c0 = arith.constant 0 : index
    %c0_0 = arith.constant 0 : index
    %0 = vector.load %arg1[%c0, %c0_0] : memref<8x128xf32, #tpu.memory_space<vmem>>, vector<8x128xf32>
    %1 = math.tanh %0 : vector<8x128xf32>
    %cst = arith.constant 5.000000e+00 : f32
    %2 = vector.broadcast %cst : f32 to vector<8x128xf32>
    %3 = arith.mulf %1, %2 : vector<8x128xf32>
    %cst_1 = arith.constant 0.000000e+00 : f32
    %4 = vector.broadcast %cst_1 : f32 to vector<8x128xf32>
    %5 = arith.addf %3, %4 : vector<8x128xf32>
    %cst_2 = arith.constant -5.000000e+00 : f32
    %6 = vector.broadcast %cst_2 : f32 to vector<8x128xf32>
    %7 = arith.subf %5, %6 : vector<8x128xf32>
    %8 = arith.mulf %7, %7 : vector<8x128xf32>
    %cst_3 = arith.constant -5.000000e-01 : f32
    %9 = vector.broadcast %cst_3 : f32 to vector<8x128xf32>
    %10 = arith.mulf %9, %8 : vector<8x128xf32>
    %11 = math.exp %10 : vector<8x128xf32>
    %cst_4 = arith.constant -3.000000e+00 : f32
    %12 = vector.broadcast %cst_4 : f32 to vector<8x128xf32>
    %13 = arith.subf %5, %12 : vector<8x128xf32>
    %14 = arith.mulf %13, %13 : vector<8x128xf32>
    %cst_5 = arith.constant -5.000000e-01 : f32
    %15 = vector.broadcast %cst_5 : f32 to vector<8x128xf32>
    %16 = arith.mulf %15, %14 : vector<8x128xf32>
    %17 = math.exp %16 : vector<8x128xf32>
    %cst_6 = arith.constant -1.000000e+00 : f32
    %18 = vector.broadcast %cst_6 : f32 to vector<8x128xf32>
    %19 = arith.subf %5, %18 : vector<8x128xf32>
    %20 = arith.mulf %19, %19 : vector<8x128xf32>
    %cst_7 = arith.constant -5.000000e-01 : f32
    %21 = vector.broadcast %cst_7 : f32 to vector<8x128xf32>
    %22 = arith.mulf %21, %20 : vector<8x128xf32>
    %23 = math.exp %22 : vector<8x128xf32>
    %cst_8 = arith.constant 1.000000e+00 : f32
    %24 = vector.broadcast %cst_8 : f32 to vector<8x128xf32>
    %25 = arith.subf %5, %24 : vector<8x128xf32>
    %26 = arith.mulf %25, %25 : vector<8x128xf32>
    %cst_9 = arith.constant -5.000000e-01 : f32
    %27 = vector.broadcast %cst_9 : f32 to vector<8x128xf32>
    %28 = arith.mulf %27, %26 : vector<8x128xf32>
    %29 = math.exp %28 : vector<8x128xf32>
    %cst_10 = arith.constant 3.000000e+00 : f32
    %30 = vector.broadcast %cst_10 : f32 to vector<8x128xf32>
    %31 = arith.subf %5, %30 : vector<8x128xf32>
    %32 = arith.mulf %31, %31 : vector<8x128xf32>
    %cst_11 = arith.constant -5.000000e-01 : f32
    %33 = vector.broadcast %cst_11 : f32 to vector<8x128xf32>
    %34 = arith.mulf %33, %32 : vector<8x128xf32>
    %35 = math.exp %34 : vector<8x128xf32>
    %cst_12 = arith.constant 5.000000e+00 : f32
    %36 = vector.broadcast %cst_12 : f32 to vector<8x128xf32>
    %37 = arith.subf %5, %36 : vector<8x128xf32>
    %38 = arith.mulf %37, %37 : vector<8x128xf32>
    %cst_13 = arith.constant -5.000000e-01 : f32
    %39 = vector.broadcast %cst_13 : f32 to vector<8x128xf32>
    %40 = arith.mulf %39, %38 : vector<8x128xf32>
    %41 = math.exp %40 : vector<8x128xf32>
    %42 = tpu.concatenate %11, %17, %23, %29, %35, %41 in 1 : vector<8x128xf32>, vector<8x128xf32>, vector<8x128xf32>, vector<8x128xf32>, vector<8x128xf32>, vector<8x128xf32> -> vector<8x768xf32>
    %c0_14 = arith.constant 0 : index
    %c0_15 = arith.constant 0 : index
    %c0_16 = arith.constant 0 : index
    %43 = vector.load %arg2[%c0_14, %c0_15, %c0_16] : memref<2x768x128xf32, #tpu.memory_space<vmem>>, vector<1x768x128xf32>
    %44 = vector.shape_cast %43 : vector<1x768x128xf32> to vector<768x128xf32>
    %cst_17 = arith.constant dense<0.000000e+00> : vector<8x128xf32>
    %45 = tpu.matmul %42, %44, %cst_17 {dimension_numbers = #tpu.dot_dimension_numbers<[1], [0], [0], [1], [0, 0, 1, 1], [], []>} : vector<8x768xf32>, vector<768x128xf32>, vector<8x128xf32> -> vector<8x128xf32>
    %46 = math.tanh %45 : vector<8x128xf32>
    %cst_18 = arith.constant 5.000000e+00 : f32
    %47 = vector.broadcast %cst_18 : f32 to vector<8x128xf32>
    %48 = arith.mulf %46, %47 : vector<8x128xf32>
    %cst_19 = arith.constant 0.000000e+00 : f32
    %49 = vector.broadcast %cst_19 : f32 to vector<8x128xf32>
    %50 = arith.addf %48, %49 : vector<8x128xf32>
    %cst_20 = arith.constant -5.000000e+00 : f32
    %51 = vector.broadcast %cst_20 : f32 to vector<8x128xf32>
    %52 = arith.subf %50, %51 : vector<8x128xf32>
    %53 = arith.mulf %52, %52 : vector<8x128xf32>
    %cst_21 = arith.constant -5.000000e-01 : f32
    %54 = vector.broadcast %cst_21 : f32 to vector<8x128xf32>
    %55 = arith.mulf %54, %53 : vector<8x128xf32>
    %56 = math.exp %55 : vector<8x128xf32>
    %cst_22 = arith.constant -3.000000e+00 : f32
    %57 = vector.broadcast %cst_22 : f32 to vector<8x128xf32>
    %58 = arith.subf %50, %57 : vector<8x128xf32>
    %59 = arith.mulf %58, %58 : vector<8x128xf32>
    %cst_23 = arith.constant -5.000000e-01 : f32
    %60 = vector.broadcast %cst_23 : f32 to vector<8x128xf32>
    %61 = arith.mulf %60, %59 : vector<8x128xf32>
    %62 = math.exp %61 : vector<8x128xf32>
    %cst_24 = arith.constant -1.000000e+00 : f32
    %63 = vector.broadcast %cst_24 : f32 to vector<8x128xf32>
    %64 = arith.subf %50, %63 : vector<8x128xf32>
    %65 = arith.mulf %64, %64 : vector<8x128xf32>
    %cst_25 = arith.constant -5.000000e-01 : f32
    %66 = vector.broadcast %cst_25 : f32 to vector<8x128xf32>
    %67 = arith.mulf %66, %65 : vector<8x128xf32>
    %68 = math.exp %67 : vector<8x128xf32>
    %cst_26 = arith.constant 1.000000e+00 : f32
    %69 = vector.broadcast %cst_26 : f32 to vector<8x128xf32>
    %70 = arith.subf %50, %69 : vector<8x128xf32>
    %71 = arith.mulf %70, %70 : vector<8x128xf32>
    %cst_27 = arith.constant -5.000000e-01 : f32
    %72 = vector.broadcast %cst_27 : f32 to vector<8x128xf32>
    %73 = arith.mulf %72, %71 : vector<8x128xf32>
    %74 = math.exp %73 : vector<8x128xf32>
    %cst_28 = arith.constant 3.000000e+00 : f32
    %75 = vector.broadcast %cst_28 : f32 to vector<8x128xf32>
    %76 = arith.subf %50, %75 : vector<8x128xf32>
    %77 = arith.mulf %76, %76 : vector<8x128xf32>
    %cst_29 = arith.constant -5.000000e-01 : f32
    %78 = vector.broadcast %cst_29 : f32 to vector<8x128xf32>
    %79 = arith.mulf %78, %77 : vector<8x128xf32>
    %80 = math.exp %79 : vector<8x128xf32>
    %cst_30 = arith.constant 5.000000e+00 : f32
    %81 = vector.broadcast %cst_30 : f32 to vector<8x128xf32>
    %82 = arith.subf %50, %81 : vector<8x128xf32>
    %83 = arith.mulf %82, %82 : vector<8x128xf32>
    %cst_31 = arith.constant -5.000000e-01 : f32
    %84 = vector.broadcast %cst_31 : f32 to vector<8x128xf32>
    %85 = arith.mulf %84, %83 : vector<8x128xf32>
    %86 = math.exp %85 : vector<8x128xf32>
    %87 = tpu.concatenate %56, %62, %68, %74, %80, %86 in 1 : vector<8x128xf32>, vector<8x128xf32>, vector<8x128xf32>, vector<8x128xf32>, vector<8x128xf32>, vector<8x128xf32> -> vector<8x768xf32>
    %c1 = arith.constant 1 : index
    %c0_32 = arith.constant 0 : index
    %c0_33 = arith.constant 0 : index
    %88 = vector.load %arg2[%c1, %c0_32, %c0_33] : memref<2x768x128xf32, #tpu.memory_space<vmem>>, vector<1x768x128xf32>
    %89 = vector.shape_cast %88 : vector<1x768x128xf32> to vector<768x128xf32>
    %cst_34 = arith.constant dense<0.000000e+00> : vector<8x128xf32>
    %90 = tpu.matmul %87, %89, %cst_34 {dimension_numbers = #tpu.dot_dimension_numbers<[1], [0], [0], [1], [0, 0, 1, 1], [], []>} : vector<8x768xf32>, vector<768x128xf32>, vector<8x128xf32> -> vector<8x128xf32>
    %c0_35 = arith.constant 0 : index
    %c0_36 = arith.constant 0 : index
    %91 = vector.load %arg3[%c0_35, %c0_36] : memref<8x128xf32, #tpu.memory_space<vmem>>, vector<8x128xf32>
    tpu.vector_store %arg3[%c0_35, %c0_36], %90 {strides = array<i32>} : memref<8x128xf32, #tpu.memory_space<vmem>>, vector<8x128xf32>,
    return
  }
  func.func @transform_0(%arg0: i32) -> (i32, i32) {
    %c0_i32 = arith.constant 0 : i32
    %c0_i32_0 = arith.constant 0 : i32
    return %arg0, %c0_i32 : i32, i32
  }
  func.func @transform_1(%arg0: i32) -> (i32, i32, i32) {
    %c0_i32 = arith.constant 0 : i32
    %c0_i32_0 = arith.constant 0 : i32
    %c0_i32_1 = arith.constant 0 : i32
    %c0_i32_2 = arith.constant 0 : i32
    return %c0_i32, %c0_i32_0, %c0_i32_1 : i32, i32, i32
  }
  func.func @transform_2(%arg0: i32) -> (i32, i32) {
    %c0_i32 = arith.constant 0 : i32
    %c0_i32_0 = arith.constant 0 : i32
    return %arg0, %c0_i32 : i32, i32
  }
}

</mosaic_0001>

<llo_original>
// kernel: tpu_custom_call.1
$region0: #{tpu_custom_call.1}
  #allocation0 [shape = 'u32[]', space=smem, size = 0x4, offset = 0x4, fixed_abs, tag = 'smem constant byte address 0x4 - core index']
  #allocation1 [shape = 'u32[72,128]{1,0:T(1,128)}', space=vmem, size = 0x9000, scoped, tag = 'internal scratch']
  %s0 = inlined_call_operand.hbm [shape: f32[8,128], index: 0, kind: input, shape index: {}]
  %s1 = inlined_call_operand.hbm [shape: f32[2,768,128], index: 1, kind: input, shape index: {}]
  %s2 = inlined_call_operand.hbm [shape: f32[8,128], index: 2, kind: output, shape index: {}]
  %s3 = sld [smem:[#allocation0]]
  $region26: #{tpu_custom_call.1} parent=0
    _
  %s5 = ssub.s32 1, %s3
  %s6 = scalar_select 0, %s5, %s3
  $region1: #{tpu_custom_call.1} parent=0
    #allocation2 [shape = 'u8[4096]{0}', space=vmem, size = 0x1000, scoped, tag = 'input window, operand 0, single buffered']
    #allocation3 [shape = 's32[1]{0}', space=sflag, size = 0x4, scoped, tag = 'scoped memory for tpu_custom_call.1']
    #allocation4 [shape = 's32[1]{0}', space=sflag, size = 0x4, scoped, tag = 'scoped memory for tpu_custom_call.1']
    #allocation5 [shape = 'u8[786432]{0}', space=vmem, size = 0xc0000, scoped, tag = 'input window, operand 1, single buffered']
    #allocation6 [shape = 's32[1]{0}', space=sflag, size = 0x4, scoped, tag = 'scoped memory for tpu_custom_call.1']
    #allocation7 [shape = 'u8[4096]{0}', space=vmem, size = 0x1000, scoped, tag = 'output window, operand 0, single buffered']
    %7 = vsyncpa [#allocation3], 0
    %8 = vsyncpa [#allocation6], 0
    %9 = vsyncpa [#allocation4], 0
    // Predicated region
    $region2: #{tpu_custom_call.1} parent=1 // pred_check
      _
    $region3: #{tpu_custom_call.1} parent=1 // pred_check_branch
      %11 = sbr.rel (0) target = $region5
    $region4: #{tpu_custom_call.1} parent=1 // pred_region
      %13 = vsyncadd [#allocation3], 0
      %s15 = sshll.u32 %s0, 4
      %s16 = int_to_ptr.hbm [resolvable:$true] %s15
      %s17 = sshll.u32 [#allocation2], 4
      %s18 = int_to_ptr.vmem [resolvable:$true] %s17
      %20 = dma.hbm_to_vmem [thread:$0]  %s16, 128, %s18, [#allocation3]
    $region5: #{tpu_custom_call.1} parent=1 // pred_fallthru
      _
    // Predicated region
    $region6: #{tpu_custom_call.1} parent=1 // pred_check
      _
    $region7: #{tpu_custom_call.1} parent=1 // pred_check_branch
      %22 = sbr.rel (0) target = $region9
    $region8: #{tpu_custom_call.1} parent=1 // pred_region
      %24 = vsyncadd [#allocation6], 0
      %s25 = sshll.u32 %s1, 4
      %s26 = int_to_ptr.hbm [resolvable:$true] %s25
      %s27 = sshll.u32 [#allocation5], 4
      %s28 = int_to_ptr.vmem [resolvable:$true] %s27
      %33 = dma.hbm_to_vmem [thread:$0]  %s26, 24576, %s28, [#allocation6], 128, 128, 8
    $region9: #{tpu_custom_call.1} parent=1 // pred_fallthru
      _
    // Predicated region
    $region10: #{tpu_custom_call.1} parent=1 // pred_check
      _
    $region11: #{tpu_custom_call.1} parent=1 // pred_check_branch
      %35 = sbr.rel (0) target = $region13
    $region12: #{tpu_custom_call.1} parent=1 // pred_region
      %37 = dma.done [#allocation3], 128
    $region13: #{tpu_custom_call.1} parent=1 // pred_fallthru
      _
    // Predicated region
    $region14: #{tpu_custom_call.1} parent=1 // pred_check
      _
    $region15: #{tpu_custom_call.1} parent=1 // pred_check_branch
      %39 = sbr.rel (0) target = $region17
    $region16: #{tpu_custom_call.1} parent=1 // pred_region
      %41 = dma.done [#allocation6], 24576
    $region17: #{tpu_custom_call.1} parent=1 // pred_fallthru
      _
    %v42 = vld [vmem:[#allocation2] sm:$0xff]
    %v43 = vtanh.pop %v42
    %v44 = vmul.f32 %v43, 5.0
    %v45 = vadd.f32 %v44, 0.0
    %v46 = vsub.f32 %v45, -5.0
    %v47 = vmul.f32 %v46, %v46
    %v48 = vmul.f32 %v47, -0.5
    %v49 = vmul.f32 %v48, 1.442695
    %v50 = vpow.pop %v49
    %v51 = vsub.f32 %v45, -3.0
    %v52 = vmul.f32 %v51, %v51
    %v53 = vmul.f32 %v52, -0.5
    %v54 = vmul.f32 %v53, 1.442695
    %v55 = vpow.pop %v54
    %v56 = vsub.f32 %v45, -1.0
    %v57 = vmul.f32 %v56, %v56
    %v58 = vmul.f32 %v57, -0.5
    %v59 = vmul.f32 %v58, 1.442695
    %v60 = vpow.pop %v59
    %v61 = vsub.f32 %v45, 1.0
    %v62 = vmul.f32 %v61, %v61
    %v63 = vmul.f32 %v62, -0.5
    %v64 = vmul.f32 %v63, 1.442695
    %v65 = vpow.pop %v64
    %v66 = vsub.f32 %v45, 3.0
    %v67 = vmul.f32 %v66, %v66
    %v68 = vmul.f32 %v67, -0.5
    %v69 = vmul.f32 %v68, 1.442695
    %v70 = vpow.pop %v69
    %v71 = vsub.f32 %v45, 5.0
    %v72 = vmul.f32 %v71, %v71
    %v73 = vmul.f32 %v72, -0.5
    %v74 = vmul.f32 %v73, 1.442695
    %v75 = vpow.pop %v74
    %v76 = vld [vmem:[#allocation5] sm:$0xff]
    %v77 = vld [vmem:[#allocation5 + $0x8] sm:$0xff]
    %v78 = vld [vmem:[#allocation5 + $0x10] sm:$0xff]
    %v79 = vld [vmem:[#allocation5 + $0x18] sm:$0xff]
    %v80 = vld [vmem:[#allocation5 + $0x20] sm:$0xff]
    %v81 = vld [vmem:[#allocation5 + $0x28] sm:$0xff]
    %v82 = vld [vmem:[#allocation5 + $0x30] sm:$0xff]
    %v83 = vld [vmem:[#allocation5 + $0x38] sm:$0xff]
    %v84 = vld [vmem:[#allocation5 + $0x40] sm:$0xff]
    %v85 = vld [vmem:[#allocation5 + $0x48] sm:$0xff]
    %v86 = vld [vmem:[#allocation5 + $0x50] sm:$0xff]
    %v87 = vld [vmem:[#allocation5 + $0x58] sm:$0xff]
    %v88 = vld [vmem:[#allocation5 + $0x60] sm:$0xff]
    %v89 = vld [vmem:[#allocation5 + $0x68] sm:$0xff]
    %v90 = vld [vmem:[#allocation5 + $0x70] sm:$0xff]
    %v91 = vld [vmem:[#allocation5 + $0x78] sm:$0xff]
    %v92 = vld [vmem:[#allocation5 + $0x80] sm:$0xff]
    %v93 = vld [vmem:[#allocation5 + $0x88] sm:$0xff]
    %v94 = vld [vmem:[#allocation5 + $0x90] sm:$0xff]
    %v95 = vld [vmem:[#allocation5 + $0x98] sm:$0xff]
    %v96 = vld [vmem:[#allocation5 + $0xa0] sm:$0xff]
    %v97 = vld [vmem:[#allocation5 + $0xa8] sm:$0xff]
    %v98 = vld [vmem:[#allocation5 + $0xb0] sm:$0xff]
    %v99 = vld [vmem:[#allocation5 + $0xb8] sm:$0xff]
    %v100 = vld [vmem:[#allocation5 + $0xc0] sm:$0xff]
    %v101 = vld [vmem:[#allocation5 + $0xc8] sm:$0xff]
    %v102 = vld [vmem:[#allocation5 + $0xd0] sm:$0xff]
    %v103 = vld [vmem:[#allocation5 + $0xd8] sm:$0xff]
    %v104 = vld [vmem:[#allocation5 + $0xe0] sm:$0xff]
    %v105 = vld [vmem:[#allocation5 + $0xe8] sm:$0xff]
    %v106 = vld [vmem:[#allocation5 + $0xf0] sm:$0xff]
    %v107 = vld [vmem:[#allocation5 + $0xf8] sm:$0xff]
    %v108 = vld [vmem:[#allocation5 + $0x100] sm:$0xff]
    %v109 = vld [vmem:[#allocation5 + $0x108] sm:$0xff]
    %v110 = vld [vmem:[#allocation5 + $0x110] sm:$0xff]
    %v111 = vld [vmem:[#allocation5 + $0x118] sm:$0xff]
    %v112 = vld [vmem:[#allocation5 + $0x120] sm:$0xff]
    %v113 = vld [vmem:[#allocation5 + $0x128] sm:$0xff]
    %v114 = vld [vmem:[#allocation5 + $0x130] sm:$0xff]
    %v115 = vld [vmem:[#allocation5 + $0x138] sm:$0xff]
    %v116 = vld [vmem:[#allocation5 + $0x140] sm:$0xff]
    %v117 = vld [vmem:[#allocation5 + $0x148] sm:$0xff]
    %v118 = vld [vmem:[#allocation5 + $0x150] sm:$0xff]
    %v119 = vld [vmem:[#allocation5 + $0x158] sm:$0xff]
    %v120 = vld [vmem:[#allocation5 + $0x160] sm:$0xff]
    %v121 = vld [vmem:[#allocation5 + $0x168] sm:$0xff]
    %v122 = vld [vmem:[#allocation5 + $0x170] sm:$0xff]
    %v123 = vld [vmem:[#allocation5 + $0x178] sm:$0xff]
    %v124 = vld [vmem:[#allocation5 + $0x180] sm:$0xff]
    %v125 = vld [vmem:[#allocation5 + $0x188] sm:$0xff]
    %v126 = vld [vmem:[#allocation5 + $0x190] sm:$0xff]
    %v127 = vld [vmem:[#allocation5 + $0x198] sm:$0xff]
    %v128 = vld [vmem:[#allocation5 + $0x1a0] sm:$0xff]
    %v129 = vld [vmem:[#allocation5 + $0x1a8] sm:$0xff]
    %v130 = vld [vmem:[#allocation5 + $0x1b0] sm:$0xff]
    %v131 = vld [vmem:[#allocation5 + $0x1b8] sm:$0xff]
    %v132 = vld [vmem:[#allocation5 + $0x1c0] sm:$0xff]
    %v133 = vld [vmem:[#allocation5 + $0x1c8] sm:$0xff]
    %v134 = vld [vmem:[#allocation5 + $0x1d0] sm:$0xff]
    %v135 = vld [vmem:[#allocation5 + $0x1d8] sm:$0xff]
    %v136 = vld [vmem:[#allocation5 + $0x1e0] sm:$0xff]
    %v137 = vld [vmem:[#allocation5 + $0x1e8] sm:$0xff]
    %v138 = vld [vmem:[#allocation5 + $0x1f0] sm:$0xff]
    %v139 = vld [vmem:[#allocation5 + $0x1f8] sm:$0xff]
    %v140 = vld [vmem:[#allocation5 + $0x200] sm:$0xff]
    %v141 = vld [vmem:[#allocation5 + $0x208] sm:$0xff]
    %v142 = vld [vmem:[#allocation5 + $0x210] sm:$0xff]
    %v143 = vld [vmem:[#allocation5 + $0x218] sm:$0xff]
    %v144 = vld [vmem:[#allocation5 + $0x220] sm:$0xff]
    %v145 = vld [vmem:[#allocation5 + $0x228] sm:$0xff]
    %v146 = vld [vmem:[#allocation5 + $0x230] sm:$0xff]
    %v147 = vld [vmem:[#allocation5 + $0x238] sm:$0xff]
    %v148 = vld [vmem:[#allocation5 + $0x240] sm:$0xff]
    %v149 = vld [vmem:[#allocation5 + $0x248] sm:$0xff]
    %v150 = vld [vmem:[#allocation5 + $0x250] sm:$0xff]
    %v151 = vld [vmem:[#allocation5 + $0x258] sm:$0xff]
    %v152 = vld [vmem:[#allocation5 + $0x260] sm:$0xff]
    %v153 = vld [vmem:[#allocation5 + $0x268] sm:$0xff]
    %v154 = vld [vmem:[#allocation5 + $0x270] sm:$0xff]
    %v155 = vld [vmem:[#allocation5 + $0x278] sm:$0xff]
    %v156 = vld [vmem:[#allocation5 + $0x280] sm:$0xff]
    %v157 = vld [vmem:[#allocation5 + $0x288] sm:$0xff]
    %v158 = vld [vmem:[#allocation5 + $0x290] sm:$0xff]
    %v159 = vld [vmem:[#allocation5 + $0x298] sm:$0xff]
    %v160 = vld [vmem:[#allocation5 + $0x2a0] sm:$0xff]
    %v161 = vld [vmem:[#allocation5 + $0x2a8] sm:$0xff]
    %v162 = vld [vmem:[#allocation5 + $0x2b0] sm:$0xff]
    %v163 = vld [vmem:[#allocation5 + $0x2b8] sm:$0xff]
    %v164 = vld [vmem:[#allocation5 + $0x2c0] sm:$0xff]
    %v165 = vld [vmem:[#allocation5 + $0x2c8] sm:$0xff]
    %v166 = vld [vmem:[#allocation5 + $0x2d0] sm:$0xff]
    %v167 = vld [vmem:[#allocation5 + $0x2d8] sm:$0xff]
    %v168 = vld [vmem:[#allocation5 + $0x2e0] sm:$0xff]
    %v169 = vld [vmem:[#allocation5 + $0x2e8] sm:$0xff]
    %v170 = vld [vmem:[#allocation5 + $0x2f0] sm:$0xff]
    %v171 = vld [vmem:[#allocation5 + $0x2f8] sm:$0xff]
    %172 = vmatpush.msra.mxu0 %v91
    %173 = vmatpush.msra.mxu0 %v90
    %174 = vmatpush.msra.mxu0 %v89
    %175 = vmatpush.msra.mxu0 %v88
    %176 = vmatpush.msra.mxu0 %v87
    %177 = vmatpush.msra.mxu0 %v86
    %178 = vmatpush.msra.mxu0 %v85
    %179 = vmatpush.msra.mxu0 %v84
    %180 = vmatpush.msra.mxu0 %v83
    %181 = vmatpush.msra.mxu0 %v82
    %182 = vmatpush.msra.mxu0 %v81
    %183 = vmatpush.msra.mxu0 %v80
    %184 = vmatpush.msra.mxu0 %v79
    %185 = vmatpush.msra.mxu0 %v78
    %186 = vmatpush.msra.mxu0 %v77
    %187 = vmatpush.msra.mxu0 %v76
    %188 = vmatmul.f32.gmra.mxu0 %v50
    %v189 = vpop.f32.mrf.mxu0
    %v190 = vadd.f32 0.0, %v189
    %191 = vdwg.mxu0
    %192 = vmatpush.msra.mxu0 %v107
    %193 = vmatpush.msra.mxu0 %v106
    %194 = vmatpush.msra.mxu0 %v105
    %195 = vmatpush.msra.mxu0 %v104
    %196 = vmatpush.msra.mxu0 %v103
    %197 = vmatpush.msra.mxu0 %v102
    %198 = vmatpush.msra.mxu0 %v101
    %199 = vmatpush.msra.mxu0 %v100
    %200 = vmatpush.msra.mxu0 %v99
    %201 = vmatpush.msra.mxu0 %v98
    %202 = vmatpush.msra.mxu0 %v97
    %203 = vmatpush.msra.mxu0 %v96
    %204 = vmatpush.msra.mxu0 %v95
    %205 = vmatpush.msra.mxu0 %v94
    %206 = vmatpush.msra.mxu0 %v93
    %207 = vmatpush.msra.mxu0 %v92
    %208 = vmatmul.f32.gmra.mxu0 %v55
    %v209 = vpop.f32.mrf.mxu0
    %v210 = vadd.f32 %v190, %v209
    %211 = vdwg.mxu0
    %212 = vmatpush.msra.mxu0 %v123
    %213 = vmatpush.msra.mxu0 %v122
    %214 = vmatpush.msra.mxu0 %v121
    %215 = vmatpush.msra.mxu0 %v120
    %216 = vmatpush.msra.mxu0 %v119
    %217 = vmatpush.msra.mxu0 %v118
    %218 = vmatpush.msra.mxu0 %v117
    %219 = vmatpush.msra.mxu0 %v116
    %220 = vmatpush.msra.mxu0 %v115
    %221 = vmatpush.msra.mxu0 %v114
    %222 = vmatpush.msra.mxu0 %v113
    %223 = vmatpush.msra.mxu0 %v112
    %224 = vmatpush.msra.mxu0 %v111
    %225 = vmatpush.msra.mxu0 %v110
    %226 = vmatpush.msra.mxu0 %v109
    %227 = vmatpush.msra.mxu0 %v108
    %228 = vmatmul.f32.gmra.mxu0 %v60
    %v229 = vpop.f32.mrf.mxu0
    %v230 = vadd.f32 %v210, %v229
    %231 = vdwg.mxu0
    %232 = vmatpush.msra.mxu0 %v139
    %233 = vmatpush.msra.mxu0 %v138
    %234 = vmatpush.msra.mxu0 %v137
    %235 = vmatpush.msra.mxu0 %v136
    %236 = vmatpush.msra.mxu0 %v135
    %237 = vmatpush.msra.mxu0 %v134
    %238 = vmatpush.msra.mxu0 %v133
    %239 = vmatpush.msra.mxu0 %v132
    %240 = vmatpush.msra.mxu0 %v131
    %241 = vmatpush.msra.mxu0 %v130
    %242 = vmatpush.msra.mxu0 %v129
    %243 = vmatpush.msra.mxu0 %v128
    %244 = vmatpush.msra.mxu0 %v127
    %245 = vmatpush.msra.mxu0 %v126
    %246 = vmatpush.msra.mxu0 %v125
    %247 = vmatpush.msra.mxu0 %v124
    %248 = vmatmul.f32.gmra.mxu0 %v65
    %v249 = vpop.f32.mrf.mxu0
    %v250 = vadd.f32 %v230, %v249
    %251 = vdwg.mxu0
    %252 = vmatpush.msra.mxu0 %v155
    %253 = vmatpush.msra.mxu0 %v154
    %254 = vmatpush.msra.mxu0 %v153
    %255 = vmatpush.msra.mxu0 %v152
    %256 = vmatpush.msra.mxu0 %v151
    %257 = vmatpush.msra.mxu0 %v150
    %258 = vmatpush.msra.mxu0 %v149
    %259 = vmatpush.msra.mxu0 %v148
    %260 = vmatpush.msra.mxu0 %v147
    %261 = vmatpush.msra.mxu0 %v146
    %262 = vmatpush.msra.mxu0 %v145
    %263 = vmatpush.msra.mxu0 %v144
    %264 = vmatpush.msra.mxu0 %v143
    %265 = vmatpush.msra.mxu0 %v142
    %266 = vmatpush.msra.mxu0 %v141
    %267 = vmatpush.msra.mxu0 %v140
    %268 = vmatmul.f32.gmra.mxu0 %v70
    %v269 = vpop.f32.mrf.mxu0
    %v270 = vadd.f32 %v250, %v269
    %271 = vdwg.mxu0
    %272 = vmatpush.msra.mxu0 %v171
    %273 = vmatpush.msra.mxu0 %v170
    %274 = vmatpush.msra.mxu0 %v169
    %275 = vmatpush.msra.mxu0 %v168
    %276 = vmatpush.msra.mxu0 %v167
    %277 = vmatpush.msra.mxu0 %v166
    %278 = vmatpush.msra.mxu0 %v165
    %279 = vmatpush.msra.mxu0 %v164
    %280 = vmatpush.msra.mxu0 %v163
    %281 = vmatpush.msra.mxu0 %v162
    %282 = vmatpush.msra.mxu0 %v161
    %283 = vmatpush.msra.mxu0 %v160
    %284 = vmatpush.msra.mxu0 %v159
    %285 = vmatpush.msra.mxu0 %v158
    %286 = vmatpush.msra.mxu0 %v157
    %287 = vmatpush.msra.mxu0 %v156
    %288 = vmatmul.f32.gmra.mxu0 %v75
    %v289 = vpop.f32.mrf.mxu0
    %v290 = vadd.f32 %v270, %v289
    %291 = vdwg.mxu0
    %v292 = vtanh.pop %v290
    %v293 = vmul.f32 %v292, 5.0
    %v294 = vadd.f32 %v293, 0.0
    %v295 = vsub.f32 %v294, -5.0
    %v296 = vmul.f32 %v295, %v295
    %v297 = vmul.f32 %v296, -0.5
    %v298 = vmul.f32 %v297, 1.442695
    %v299 = vpow.pop %v298
    %v300 = vsub.f32 %v294, -3.0
    %v301 = vmul.f32 %v300, %v300
    %v302 = vmul.f32 %v301, -0.5
    %v303 = vmul.f32 %v302, 1.442695
    %v304 = vpow.pop %v303
    %v305 = vsub.f32 %v294, -1.0
    %v306 = vmul.f32 %v305, %v305
    %v307 = vmul.f32 %v306, -0.5
    %v308 = vmul.f32 %v307, 1.442695
    %v309 = vpow.pop %v308
    %v310 = vsub.f32 %v294, 1.0
    %v311 = vmul.f32 %v310, %v310
    %v312 = vmul.f32 %v311, -0.5
    %v313 = vmul.f32 %v312, 1.442695
    %v314 = vpow.pop %v313
    %v315 = vsub.f32 %v294, 3.0
    %v316 = vmul.f32 %v315, %v315
    %v317 = vmul.f32 %v316, -0.5
    %v318 = vmul.f32 %v317, 1.442695
    %v319 = vpow.pop %v318
    %v320 = vsub.f32 %v294, 5.0
    %v321 = vmul.f32 %v320, %v320
    %v322 = vmul.f32 %v321, -0.5
    %v323 = vmul.f32 %v322, 1.442695
    %v324 = vpow.pop %v323
    %s325 = scalar_lea.vmem [#allocation5], 768
    %v326 = vld [vmem:[%s325] sm:$0xff]
    %v327 = vld [vmem:[%s325 + $0x8] sm:$0xff]
    %v328 = vld [vmem:[%s325 + $0x10] sm:$0xff]
    %v329 = vld [vmem:[%s325 + $0x18] sm:$0xff]
    %v330 = vld [vmem:[%s325 + $0x20] sm:$0xff]
    %v331 = vld [vmem:[%s325 + $0x28] sm:$0xff]
    %v332 = vld [vmem:[%s325 + $0x30] sm:$0xff]
    %v333 = vld [vmem:[%s325 + $0x38] sm:$0xff]
    %v334 = vld [vmem:[%s325 + $0x40] sm:$0xff]
    %v335 = vld [vmem:[%s325 + $0x48] sm:$0xff]
    %v336 = vld [vmem:[%s325 + $0x50] sm:$0xff]
    %v337 = vld [vmem:[%s325 + $0x58] sm:$0xff]
    %v338 = vld [vmem:[%s325 + $0x60] sm:$0xff]
    %v339 = vld [vmem:[%s325 + $0x68] sm:$0xff]
    %v340 = vld [vmem:[%s325 + $0x70] sm:$0xff]
    %v341 = vld [vmem:[%s325 + $0x78] sm:$0xff]
    %v342 = vld [vmem:[%s325 + $0x80] sm:$0xff]
    %v343 = vld [vmem:[%s325 + $0x88] sm:$0xff]
    %v344 = vld [vmem:[%s325 + $0x90] sm:$0xff]
    %v345 = vld [vmem:[%s325 + $0x98] sm:$0xff]
    %v346 = vld [vmem:[%s325 + $0xa0] sm:$0xff]
    %v347 = vld [vmem:[%s325 + $0xa8] sm:$0xff]
    %v348 = vld [vmem:[%s325 + $0xb0] sm:$0xff]
    %v349 = vld [vmem:[%s325 + $0xb8] sm:$0xff]
    %v350 = vld [vmem:[%s325 + $0xc0] sm:$0xff]
    %v351 = vld [vmem:[%s325 + $0xc8] sm:$0xff]
    %v352 = vld [vmem:[%s325 + $0xd0] sm:$0xff]
    %v353 = vld [vmem:[%s325 + $0xd8] sm:$0xff]
    %v354 = vld [vmem:[%s325 + $0xe0] sm:$0xff]
    %v355 = vld [vmem:[%s325 + $0xe8] sm:$0xff]
    %v356 = vld [vmem:[%s325 + $0xf0] sm:$0xff]
    %v357 = vld [vmem:[%s325 + $0xf8] sm:$0xff]
    %v358 = vld [vmem:[%s325 + $0x100] sm:$0xff]
    %v359 = vld [vmem:[%s325 + $0x108] sm:$0xff]
    %v360 = vld [vmem:[%s325 + $0x110] sm:$0xff]
    %v361 = vld [vmem:[%s325 + $0x118] sm:$0xff]
    %v362 = vld [vmem:[%s325 + $0x120] sm:$0xff]
    %v363 = vld [vmem:[%s325 + $0x128] sm:$0xff]
    %v364 = vld [vmem:[%s325 + $0x130] sm:$0xff]
    %v365 = vld [vmem:[%s325 + $0x138] sm:$0xff]
    %v366 = vld [vmem:[%s325 + $0x140] sm:$0xff]
    %v367 = vld [vmem:[%s325 + $0x148] sm:$0xff]
    %v368 = vld [vmem:[%s325 + $0x150] sm:$0xff]
    %v369 = vld [vmem:[%s325 + $0x158] sm:$0xff]
    %v370 = vld [vmem:[%s325 + $0x160] sm:$0xff]
    %v371 = vld [vmem:[%s325 + $0x168] sm:$0xff]
    %v372 = vld [vmem:[%s325 + $0x170] sm:$0xff]
    %v373 = vld [vmem:[%s325 + $0x178] sm:$0xff]
    %v374 = vld [vmem:[%s325 + $0x180] sm:$0xff]
    %v375 = vld [vmem:[%s325 + $0x188] sm:$0xff]
    %v376 = vld [vmem:[%s325 + $0x190] sm:$0xff]
    %v377 = vld [vmem:[%s325 + $0x198] sm:$0xff]
    %v378 = vld [vmem:[%s325 + $0x1a0] sm:$0xff]
    %v379 = vld [vmem:[%s325 + $0x1a8] sm:$0xff]
    %v380 = vld [vmem:[%s325 + $0x1b0] sm:$0xff]
    %v381 = vld [vmem:[%s325 + $0x1b8] sm:$0xff]
    %v382 = vld [vmem:[%s325 + $0x1c0] sm:$0xff]
    %v383 = vld [vmem:[%s325 + $0x1c8] sm:$0xff]
    %v384 = vld [vmem:[%s325 + $0x1d0] sm:$0xff]
    %v385 = vld [vmem:[%s325 + $0x1d8] sm:$0xff]
    %v386 = vld [vmem:[%s325 + $0x1e0] sm:$0xff]
    %v387 = vld [vmem:[%s325 + $0x1e8] sm:$0xff]
    %v388 = vld [vmem:[%s325 + $0x1f0] sm:$0xff]
    %v389 = vld [vmem:[%s325 + $0x1f8] sm:$0xff]
    %v390 = vld [vmem:[%s325 + $0x200] sm:$0xff]
    %v391 = vld [vmem:[%s325 + $0x208] sm:$0xff]
    %v392 = vld [vmem:[%s325 + $0x210] sm:$0xff]
    %v393 = vld [vmem:[%s325 + $0x218] sm:$0xff]
    %v394 = vld [vmem:[%s325 + $0x220] sm:$0xff]
    %v395 = vld [vmem:[%s325 + $0x228] sm:$0xff]
    %v396 = vld [vmem:[%s325 + $0x230] sm:$0xff]
    %v397 = vld [vmem:[%s325 + $0x238] sm:$0xff]
    %v398 = vld [vmem:[%s325 + $0x240] sm:$0xff]
    %v399 = vld [vmem:[%s325 + $0x248] sm:$0xff]
    %v400 = vld [vmem:[%s325 + $0x250] sm:$0xff]
    %v401 = vld [vmem:[%s325 + $0x258] sm:$0xff]
    %v402 = vld [vmem:[%s325 + $0x260] sm:$0xff]
    %v403 = vld [vmem:[%s325 + $0x268] sm:$0xff]
    %v404 = vld [vmem:[%s325 + $0x270] sm:$0xff]
    %v405 = vld [vmem:[%s325 + $0x278] sm:$0xff]
    %v406 = vld [vmem:[%s325 + $0x280] sm:$0xff]
    %v407 = vld [vmem:[%s325 + $0x288] sm:$0xff]
    %v408 = vld [vmem:[%s325 + $0x290] sm:$0xff]
    %v409 = vld [vmem:[%s325 + $0x298] sm:$0xff]
    %v410 = vld [vmem:[%s325 + $0x2a0] sm:$0xff]
    %v411 = vld [vmem:[%s325 + $0x2a8] sm:$0xff]
    %v412 = vld [vmem:[%s325 + $0x2b0] sm:$0xff]
    %v413 = vld [vmem:[%s325 + $0x2b8] sm:$0xff]
    %v414 = vld [vmem:[%s325 + $0x2c0] sm:$0xff]
    %v415 = vld [vmem:[%s325 + $0x2c8] sm:$0xff]
    %v416 = vld [vmem:[%s325 + $0x2d0] sm:$0xff]
    %v417 = vld [vmem:[%s325 + $0x2d8] sm:$0xff]
    %v418 = vld [vmem:[%s325 + $0x2e0] sm:$0xff]
    %v419 = vld [vmem:[%s325 + $0x2e8] sm:$0xff]
    %v420 = vld [vmem:[%s325 + $0x2f0] sm:$0xff]
    %v421 = vld [vmem:[%s325 + $0x2f8] sm:$0xff]
    %422 = vmatpush.msra.mxu0 %v341
    %423 = vmatpush.msra.mxu0 %v340
    %424 = vmatpush.msra.mxu0 %v339
    %425 = vmatpush.msra.mxu0 %v338
    %426 = vmatpush.msra.mxu0 %v337
    %427 = vmatpush.msra.mxu0 %v336
    %428 = vmatpush.msra.mxu0 %v335
    %429 = vmatpush.msra.mxu0 %v334
    %430 = vmatpush.msra.mxu0 %v333
    %431 = vmatpush.msra.mxu0 %v332
    %432 = vmatpush.msra.mxu0 %v331
    %433 = vmatpush.msra.mxu0 %v330
    %434 = vmatpush.msra.mxu0 %v329
    %435 = vmatpush.msra.mxu0 %v328
    %436 = vmatpush.msra.mxu0 %v327
    %437 = vmatpush.msra.mxu0 %v326
    %438 = vmatmul.f32.gmra.mxu0 %v299
    %v439 = vpop.f32.mrf.mxu0
    %v440 = vadd.f32 0.0, %v439
    %441 = vdwg.mxu0
    %442 = vmatpush.msra.mxu0 %v357
    %443 = vmatpush.msra.mxu0 %v356
    %444 = vmatpush.msra.mxu0 %v355
    %445 = vmatpush.msra.mxu0 %v354
    %446 = vmatpush.msra.mxu0 %v353
    %447 = vmatpush.msra.mxu0 %v352
    %448 = vmatpush.msra.mxu0 %v351
    %449 = vmatpush.msra.mxu0 %v350
    %450 = vmatpush.msra.mxu0 %v349
    %451 = vmatpush.msra.mxu0 %v348
    %452 = vmatpush.msra.mxu0 %v347
    %453 = vmatpush.msra.mxu0 %v346
    %454 = vmatpush.msra.mxu0 %v345
    %455 = vmatpush.msra.mxu0 %v344
    %456 = vmatpush.msra.mxu0 %v343
    %457 = vmatpush.msra.mxu0 %v342
    %458 = vmatmul.f32.gmra.mxu0 %v304
    %v459 = vpop.f32.mrf.mxu0
    %v460 = vadd.f32 %v440, %v459
    %461 = vdwg.mxu0
    %462 = vmatpush.msra.mxu0 %v373
    %463 = vmatpush.msra.mxu0 %v372
    %464 = vmatpush.msra.mxu0 %v371
    %465 = vmatpush.msra.mxu0 %v370
    %466 = vmatpush.msra.mxu0 %v369
    %467 = vmatpush.msra.mxu0 %v368
    %468 = vmatpush.msra.mxu0 %v367
    %469 = vmatpush.msra.mxu0 %v366
    %470 = vmatpush.msra.mxu0 %v365
    %471 = vmatpush.msra.mxu0 %v364
    %472 = vmatpush.msra.mxu0 %v363
    %473 = vmatpush.msra.mxu0 %v362
    %474 = vmatpush.msra.mxu0 %v361
    %475 = vmatpush.msra.mxu0 %v360
    %476 = vmatpush.msra.mxu0 %v359
    %477 = vmatpush.msra.mxu0 %v358
    %478 = vmatmul.f32.gmra.mxu0 %v309
    %v479 = vpop.f32.mrf.mxu0
    %v480 = vadd.f32 %v460, %v479
    %481 = vdwg.mxu0
    %482 = vmatpush.msra.mxu0 %v389
    %483 = vmatpush.msra.mxu0 %v388
    %484 = vmatpush.msra.mxu0 %v387
    %485 = vmatpush.msra.mxu0 %v386
    %486 = vmatpush.msra.mxu0 %v385
    %487 = vmatpush.msra.mxu0 %v384
    %488 = vmatpush.msra.mxu0 %v383
    %489 = vmatpush.msra.mxu0 %v382
    %490 = vmatpush.msra.mxu0 %v381
    %491 = vmatpush.msra.mxu0 %v380
    %492 = vmatpush.msra.mxu0 %v379
    %493 = vmatpush.msra.mxu0 %v378
    %494 = vmatpush.msra.mxu0 %v377
    %495 = vmatpush.msra.mxu0 %v376
    %496 = vmatpush.msra.mxu0 %v375
    %497 = vmatpush.msra.mxu0 %v374
    %498 = vmatmul.f32.gmra.mxu0 %v314
    %v499 = vpop.f32.mrf.mxu0
    %v500 = vadd.f32 %v480, %v499
    %501 = vdwg.mxu0
    %502 = vmatpush.msra.mxu0 %v405
    %503 = vmatpush.msra.mxu0 %v404
    %504 = vmatpush.msra.mxu0 %v403
    %505 = vmatpush.msra.mxu0 %v402
    %506 = vmatpush.msra.mxu0 %v401
    %507 = vmatpush.msra.mxu0 %v400
    %508 = vmatpush.msra.mxu0 %v399
    %509 = vmatpush.msra.mxu0 %v398
    %510 = vmatpush.msra.mxu0 %v397
    %511 = vmatpush.msra.mxu0 %v396
    %512 = vmatpush.msra.mxu0 %v395
    %513 = vmatpush.msra.mxu0 %v394
    %514 = vmatpush.msra.mxu0 %v393
    %515 = vmatpush.msra.mxu0 %v392
    %516 = vmatpush.msra.mxu0 %v391
    %517 = vmatpush.msra.mxu0 %v390
    %518 = vmatmul.f32.gmra.mxu0 %v319
    %v519 = vpop.f32.mrf.mxu0
    %v520 = vadd.f32 %v500, %v519
    %521 = vdwg.mxu0
    %522 = vmatpush.msra.mxu0 %v421
    %523 = vmatpush.msra.mxu0 %v420
    %524 = vmatpush.msra.mxu0 %v419
    %525 = vmatpush.msra.mxu0 %v418
    %526 = vmatpush.msra.mxu0 %v417
    %527 = vmatpush.msra.mxu0 %v416
    %528 = vmatpush.msra.mxu0 %v415
    %529 = vmatpush.msra.mxu0 %v414
    %530 = vmatpush.msra.mxu0 %v413
    %531 = vmatpush.msra.mxu0 %v412
    %532 = vmatpush.msra.mxu0 %v411
    %533 = vmatpush.msra.mxu0 %v410
    %534 = vmatpush.msra.mxu0 %v409
    %535 = vmatpush.msra.mxu0 %v408
    %536 = vmatpush.msra.mxu0 %v407
    %537 = vmatpush.msra.mxu0 %v406
    %538 = vmatmul.f32.gmra.mxu0 %v324
    %v539 = vpop.f32.mrf.mxu0
    %v540 = vadd.f32 %v520, %v539
    %541 = vdwg.mxu0
    %542 = vst [vmem:[#allocation7] sm:$0xff] %v540
    // Predicated region
    $region18: #{tpu_custom_call.1} parent=1 // pred_check
      _
    $region19: #{tpu_custom_call.1} parent=1 // pred_check_branch
      %544 = sbr.rel (0) target = $region21
    $region20: #{tpu_custom_call.1} parent=1 // pred_region
      %546 = vsyncadd [#allocation4], 0
      %s548 = sshll.u32 [#allocation7], 4
      %s549 = int_to_ptr.vmem [resolvable:$true] %s548
      %s550 = sshll.u32 %s2, 4
      %s551 = int_to_ptr.hbm [resolvable:$true] %s550
      %553 = dma.vmem_to_hbm [thread:$0]  %s549, 128, %s551, [#allocation4]
    $region21: #{tpu_custom_call.1} parent=1 // pred_fallthru
      _
    // Predicated region
    $region22: #{tpu_custom_call.1} parent=1 // pred_check
      _
    $region23: #{tpu_custom_call.1} parent=1 // pred_check_branch
      %555 = sbr.rel (0) target = $region25
    $region24: #{tpu_custom_call.1} parent=1 // pred_region
      %557 = dma.done [#allocation4], 128
    $region25: #{tpu_custom_call.1} parent=1 // pred_fallthru
      _
    %558 = vsyncpa [#allocation3], 1
    %559 = vsyncpa [#allocation6], 1
    %560 = vsyncpa [#allocation4], 1

</llo_original>
